<compile_context>
chip_gen: v5e
topology: v5e:2x2
jax: 0.10.0
libtpu: 0.0.40
codegen_flags: <defaults>
</compile_context>

<pallas_src>
import math

import jax
import jax.numpy as jnp
from jax.experimental import pallas as pl
from jax.experimental.pallas import tpu as pltpu

_LANE = 128
_SUBLANE = 8
_VMEM_BUDGET = 40 * 1024 * 1024      # per-step working-set target (fits v7x 64 MiB)
_VMEM_LIMIT_CAP = 48 * 1024 * 1024   # explicit scoped-VMEM limit cap


def _round_up(x, m):
    return ((x + m - 1) // m) * m


# ---------------------------------------------------------------------------
# Kernels
# ---------------------------------------------------------------------------
def _mlp_resident_kernel(feat_ref, w1_ref, b1_ref, w2_ref, b2_ref, out_ref):
    """Fast path: full F dimension resident -> single fused MLP per batch tile."""
    h = jnp.dot(feat_ref[...], w1_ref[...], preferred_element_type=jnp.float32)
    h = jnp.tanh(h + b1_ref[...].astype(jnp.float32))
    o = jnp.dot(h.astype(w2_ref.dtype), w2_ref[...],
                preferred_element_type=jnp.float32)
    out_ref[...] = (o + b2_ref[...].astype(jnp.float32)).astype(out_ref.dtype)


def _mlp_ktiled_kernel(feat_ref, w1_ref, b1_ref, w2_ref, b2_ref, out_ref, acc_ref):
    """Accumulate feat @ W1 over F tiles; bias+tanh+2nd matmul only in epilogue."""
    k = pl.program_id(1)

    @pl.when(k == 0)
    def _():
        acc_ref[...] = jnp.zeros_like(acc_ref)

    acc_ref[...] += jnp.dot(feat_ref[...], w1_ref[...],
                            preferred_element_type=jnp.float32)

    @pl.when(k == pl.num_programs(1) - 1)
    def _():
        h = jnp.tanh(acc_ref[...] + b1_ref[...].astype(jnp.float32))
        o = jnp.dot(h.astype(w2_ref.dtype), w2_ref[...],
                    preferred_element_type=jnp.float32)
        out_ref[...] = (o + b2_ref[...].astype(jnp.float32)).astype(out_ref.dtype)


# ---------------------------------------------------------------------------
# Parameter preparation (done ONCE, outside the per-call path)
# ---------------------------------------------------------------------------
def init_params(key, n_u, n_y, n_x, seq_len, hidden_size):
    """Deterministic init mirroring nn.Linear default (uniform +/- 1/sqrt(fan_in))."""
    f_in = (n_u + n_y) * seq_len
    k1, k2, k3, k4 = jax.random.split(key, 4)
    lim1 = 1.0 / math.sqrt(f_in)
    lim2 = 1.0 / math.sqrt(hidden_size)
    return {
        "w1": jax.random.uniform(k1, (f_in, hidden_size), jnp.float32, -lim1, lim1),
        "b1": jax.random.uniform(k2, (hidden_size,), jnp.float32, -lim1, lim1),
        "w2": jax.random.uniform(k3, (hidden_size, n_x), jnp.float32, -lim2, lim2),
        "b2": jax.random.uniform(k4, (n_x,), jnp.float32, -lim2, lim2),
    }


def prepare_params(params, *, use_bf16_matmul=True):
    """Pad / cast weights once so per-call HBM traffic is only the streamed tiles.

    Weight layout: (in_features, out_features) — transposed vs. torch.nn.Linear.
    Zero padding of F / H / n_x is mathematically exact.
    """
    w1, b1, w2, b2 = params["w1"], params["b1"], params["w2"], params["b2"]
    F, H = w1.shape
    n_x = w2.shape[1]
    F_pad = _round_up(F, _LANE)
    H_pad = _round_up(H, _LANE)
    NX_pad = _round_up(n_x, _LANE)
    cdtype = jnp.bfloat16 if use_bf16_matmul else jnp.float32

    return {
        "w1": jnp.pad(w1, ((0, F_pad - F), (0, H_pad - H))).astype(cdtype),
        "w2": jnp.pad(w2, ((0, H_pad - H), (0, NX_pad - n_x))).astype(cdtype),
        "b1": jnp.pad(b1, (0, H_pad - H)).reshape(1, H_pad).astype(jnp.float32),
        "b2": jnp.pad(b2, (0, NX_pad - n_x)).reshape(1, NX_pad).astype(jnp.float32),
        "F": F, "F_pad": F_pad, "H_pad": H_pad,
        "n_x": n_x, "NX_pad": NX_pad,
        "compute_dtype": cdtype,
    }


# ---------------------------------------------------------------------------
# Tile planning
# ---------------------------------------------------------------------------
def _largest_divisor_tile(total, cap):
    """Largest multiple of 128 that divides `total` and is <= cap (floor 128)."""
    best = _LANE
    t = _LANE
    while t <= min(cap, total):
        if total % t == 0:
            best = t
        t += _LANE
    return best


def _resident_vmem_bytes(TB, F_pad, H_pad, NX_pad, itemsize):
    return (2 * TB * F_pad * itemsize              # feat (double-buffered)
            + 2 * F_pad * H_pad * itemsize         # W1 (constant map, 2 bufs)
            + 2 * H_pad * NX_pad * itemsize        # W2
            + 2 * _SUBLANE * (H_pad + NX_pad) * 4  # biases
            + 2 * TB * NX_pad * 4                  # output
            + TB * H_pad * 4)                      # hidden intermediate


def _ktiled_vmem_bytes(TB, TK, H_pad, NX_pad, itemsize):
    return (2 * TB * TK * itemsize                 # feat tile
            + 2 * TK * H_pad * itemsize            # W1 slab
            + 2 * H_pad * NX_pad * itemsize        # W2 (resident)
            + 2 * _SUBLANE * (H_pad + NX_pad) * 4  # biases
            + 2 * TB * NX_pad * 4                  # output
            + TB * H_pad * 4)                      # f32 accumulator scratch


# ---------------------------------------------------------------------------
# Forward wrapper
# ---------------------------------------------------------------------------
def feedforward_state_estimator(u, y, prepared, *, batch_first=False,
                                tb_cap=1024, tk_cap=2048, force_ktiled=False):
    """Pallas-backed forward pass. `prepared` comes from prepare_params()."""
    # ---- layout glue (cheap, stays in plain JAX) --------------------------
    uy = jnp.concatenate((u, y), axis=-1)
    if not batch_first:
        uy = jnp.swapaxes(uy, 0, 1)                  # (batch, seq, n_u + n_y)
    batch = uy.shape[0]
    feat = uy.reshape(batch, -1)                     # (batch, F)

    F, F_pad = prepared["F"], prepared["F_pad"]
    H_pad, NX_pad = prepared["H_pad"], prepared["NX_pad"]
    n_x = prepared["n_x"]
    cdtype = prepared["compute_dtype"]
    itemsize = jnp.dtype(cdtype).itemsize
    assert feat.shape[1] == F, "seq_len/n_u/n_y inconsistent with prepared weights"

    w1_p, b1_p = prepared["w1"], prepared["b1"]
    w2_p, b2_p = prepared["w2"], prepared["b2"]

    # ---- batch tile: big tiles, but keep nb >= 2 for megacore (v7x) -------
    TB = min(tb_cap, _round_up(batch, _SUBLANE))
    if batch >= 16:
        TB = min(TB, max(_SUBLANE, _round_up(-(-batch // 2), _SUBLANE)))
    B_pad = _round_up(batch, TB)
    nb = B_pad // TB

    def _pad_feat(b_pad):
        return jnp.pad(feat, ((0, b_pad - batch), (0, F_pad - F))).astype(cdtype)

    # ---- resident-W1 fast path vs. F-tiled accumulator path ---------------
    resident = (not force_ktiled
                and F_pad * H_pad * itemsize <= 12 * 1024 * 1024
                and _resident_vmem_bytes(TB, F_pad, H_pad, NX_pad, itemsize)
                    <= _VMEM_BUDGET)

    if resident:
        feat_p = _pad_feat(B_pad)
        vmem_est = _resident_vmem_bytes(TB, F_pad, H_pad, NX_pad, itemsize)
        grid_spec = pltpu.PrefetchScalarGridSpec(
            num_scalar_prefetch=0,
            grid=(nb,),
            in_specs=[
                pl.BlockSpec((TB, F_pad), lambda i: (i, 0)),        # feat tile
                pl.BlockSpec((F_pad, H_pad), lambda i: (0, 0)),     # W1 (resident)
                pl.BlockSpec((1, H_pad), lambda i: (0, 0)),         # b1
                pl.BlockSpec((H_pad, NX_pad), lambda i: (0, 0)),    # W2 (resident)
                pl.BlockSpec((1, NX_pad), lambda i: (0, 0)),        # b2
            ],
            out_specs=pl.BlockSpec((TB, NX_pad), lambda i: (i, 0)),
        )
        kernel = _mlp_resident_kernel
        dim_sem = ("parallel",)
    else:
        TK = _largest_divisor_tile(F_pad, tk_cap)
        while (_ktiled_vmem_bytes(TB, TK, H_pad, NX_pad, itemsize) > _VMEM_BUDGET
               and TK > _LANE):
            TK = _largest_divisor_tile(F_pad, TK // 2)
        while (_ktiled_vmem_bytes(TB, TK, H_pad, NX_pad, itemsize) > _VMEM_BUDGET
               and TB > _SUBLANE):
            TB = max(_SUBLANE, _round_up(TB // 2, _SUBLANE))
        B_pad = _round_up(batch, TB)
        nb = B_pad // TB
        nk = F_pad // TK
        feat_p = _pad_feat(B_pad)
        vmem_est = _ktiled_vmem_bytes(TB, TK, H_pad, NX_pad, itemsize)
        grid_spec = pltpu.PrefetchScalarGridSpec(
            num_scalar_prefetch=0,
            grid=(nb, nk),
            in_specs=[
                pl.BlockSpec((TB, TK), lambda i, k: (i, k)),          # feat tile
                pl.BlockSpec((TK, H_pad), lambda i, k: (k, 0)),       # W1 slab
                pl.BlockSpec((1, H_pad), lambda i, k: (0, 0)),        # b1
                pl.BlockSpec((H_pad, NX_pad), lambda i, k: (0, 0)),   # W2 (resident)
                pl.BlockSpec((1, NX_pad), lambda i, k: (0, 0)),       # b2
            ],
            out_specs=pl.BlockSpec((TB, NX_pad), lambda i, k: (i, 0)),
            scratch_shapes=[pltpu.VMEM((TB, H_pad), jnp.float32)],    # accumulator
        )
        kernel = _mlp_ktiled_kernel
        dim_sem = ("parallel", "arbitrary")

    flops = 2 * B_pad * (F_pad * H_pad + H_pad * NX_pad)
    bytes_accessed = int(feat_p.size * itemsize
                         + w1_p.size * itemsize + w2_p.size * itemsize
                         + b1_p.size * 4 + b2_p.size * 4
                         + B_pad * NX_pad * 4)
    cost = pl.CostEstimate(flops=flops, transcendentals=B_pad * H_pad,
                           bytes_accessed=bytes_accessed)

    vmem_limit = int(min(_VMEM_LIMIT_CAP, max(2 * vmem_est, 8 * 1024 * 1024)))

    out_padded = pl.pallas_call(
        kernel,
        out_shape=jax.ShapeDtypeStruct((B_pad, NX_pad), jnp.float32),
        grid_spec=grid_spec,
        compiler_params=pltpu.CompilerParams(
            dimension_semantics=dim_sem,
            vmem_limit_bytes=vmem_limit,
        ),
        cost_estimate=cost,
    )(feat_p, w1_p, b1_p, w2_p, b2_p)

    # Strip padding (free layout plumbing).
    return out_padded[:batch, :n_x]


# ---------------------------------------------------------------------------
# Demo / self-test
# ---------------------------------------------------------------------------
if __name__ == "__main__":
    # Small shapes consistent with the module (batch_first=False).
    n_u, n_y, n_x = 2, 1, 3
    seq_len, hidden_size, batch = 8, 32, 2

    key = jax.random.PRNGKey(0)
    ku, ky, kp = jax.random.split(key, 3)
    u = jax.random.normal(ku, (seq_len, batch, n_u), jnp.float32)
    y = jax.random.normal(ky, (seq_len, batch, n_y), jnp.float32)
    params = init_params(kp, n_u, n_y, n_x, seq_len, hidden_size)

    # Pure-JAX reference.
    uy = jnp.swapaxes(jnp.concatenate((u, y), axis=-1), 0, 1).reshape(batch, -1)
    ref = jnp.tanh(uy @ params["w1"] + params["b1"]) @ params["w2"] + params["b2"]

    # Default path: bf16 MXU operands, f32 accumulation, resident-W1 fast path.
    prep_bf16 = prepare_params(params, use_bf16_matmul=True)
    x_bf16 = jax.block_until_ready(
        feedforward_state_estimator(u, y, prep_bf16, batch_first=False))
    assert x_bf16.shape == (batch, n_x)
    assert jnp.allclose(x_bf16, ref, atol=2e-2, rtol=2e-2)

    # f32 path: tight tolerance.
    prep_f32 = prepare_params(params, use_bf16_matmul=False)
    x_f32 = jax.block_until_ready(
        feedforward_state_estimator(u, y, prep_f32, batch_first=False))
    assert jnp.allclose(x_f32, ref, atol=1e-5, rtol=1e-5)

    # Exercise the F-tiled accumulator path (nk > 1) at small scale.
    seq_len2 = 96
    params2 = init_params(kp, n_u, n_y, n_x, seq_len2, hidden_size)
    u2 = jax.random.normal(ku, (seq_len2, batch, n_u), jnp.float32)
    y2 = jax.random.normal(ky, (seq_len2, batch, n_y), jnp.float32)
    uy2 = jnp.swapaxes(jnp.concatenate((u2, y2), axis=-1), 0, 1).reshape(batch, -1)
    ref2 = (jnp.tanh(uy2 @ params2["w1"] + params2["b1"]) @ params2["w2"]
            + params2["b2"])
    prep2 = prepare_params(params2, use_bf16_matmul=False)
    x2 = jax.block_until_ready(
        feedforward_state_estimator(u2, y2, prep2, batch_first=False,
                                    force_ktiled=True, tk_cap=128))
    assert x2.shape == (batch, n_x)
    assert jnp.allclose(x2, ref2, atol=1e-4, rtol=1e-4)

    print("KERNEL_OK")
</pallas_src>

<mosaic_0001>
module attributes {stable_mosaic.version = 11 : i64} {
  func.func @_mlp_resident_kernel(%arg0: i32, %arg1: memref<8x128xbf16, #tpu.memory_space<vmem>>, %arg2: memref<128x128xbf16, #tpu.memory_space<vmem>>, %arg3: memref<1x128xf32, #tpu.memory_space<vmem>>, %arg4: memref<128x128xbf16, #tpu.memory_space<vmem>>, %arg5: memref<1x128xf32, #tpu.memory_space<vmem>>, %arg6: memref<8x128xf32, #tpu.memory_space<vmem>>) attributes {dimension_semantics = [#tpu.dimension_semantics<parallel>], iteration_bounds = array<i64: 1>, scalar_prefetch = 0 : i64, scratch_operands = 0 : i64, tpu.core_type = #tpu.core_type<tc>, window_params = [{transform_indices = @transform_0, window_bounds = array<i64: 8, 128>}, {pipeline_mode = #tpu.pipeline_mode<synchronous>, transform_indices = @transform_1, window_bounds = array<i64: 128, 128>}, {pipeline_mode = #tpu.pipeline_mode<synchronous>, transform_indices = @transform_2, window_bounds = array<i64: 1, 128>}, {pipeline_mode = #tpu.pipeline_mode<synchronous>, transform_indices = @transform_3, window_bounds = array<i64: 128, 128>}, {pipeline_mode = #tpu.pipeline_mode<synchronous>, transform_indices = @transform_4, window_bounds = array<i64: 1, 128>}, {transform_indices = @transform_5, window_bounds = array<i64: 8, 128>}]} {
    %c0 = arith.constant 0 : index
    %c0_0 = arith.constant 0 : index
    %0 = vector.load %arg1[%c0, %c0_0] : memref<8x128xbf16, #tpu.memory_space<vmem>>, vector<8x128xbf16>
    %c0_1 = arith.constant 0 : index
    %c0_2 = arith.constant 0 : index
    %1 = vector.load %arg2[%c0_1, %c0_2] : memref<128x128xbf16, #tpu.memory_space<vmem>>, vector<128x128xbf16>
    %cst = arith.constant dense<0.000000e+00> : vector<8x128xf32>
    %2 = tpu.matmul %0, %1, %cst {dimension_numbers = #tpu.dot_dimension_numbers<[1], [0], [0], [1], [0, 0, 1, 1], [], []>} : vector<8x128xbf16>, vector<128x128xbf16>, vector<8x128xf32> -> vector<8x128xf32>
    %c0_3 = arith.constant 0 : index
    %c0_4 = arith.constant 0 : index
    %3 = vector.load %arg3[%c0_3, %c0_4] : memref<1x128xf32, #tpu.memory_space<vmem>>, vector<1x128xf32>
    %4 = vector.broadcast %3 : vector<1x128xf32> to vector<8x128xf32>
    %5 = arith.addf %2, %4 : vector<8x128xf32>
    %6 = math.tanh %5 : vector<8x128xf32>
    %7 = arith.truncf %6 : vector<8x128xf32> to vector<8x128xbf16>
    %c0_5 = arith.constant 0 : index
    %c0_6 = arith.constant 0 : index
    %8 = vector.load %arg4[%c0_5, %c0_6] : memref<128x128xbf16, #tpu.memory_space<vmem>>, vector<128x128xbf16>
    %cst_7 = arith.constant dense<0.000000e+00> : vector<8x128xf32>
    %9 = tpu.matmul %7, %8, %cst_7 {dimension_numbers = #tpu.dot_dimension_numbers<[1], [0], [0], [1], [0, 0, 1, 1], [], []>} : vector<8x128xbf16>, vector<128x128xbf16>, vector<8x128xf32> -> vector<8x128xf32>
    %c0_8 = arith.constant 0 : index
    %c0_9 = arith.constant 0 : index
    %10 = vector.load %arg5[%c0_8, %c0_9] : memref<1x128xf32, #tpu.memory_space<vmem>>, vector<1x128xf32>
    %11 = vector.broadcast %10 : vector<1x128xf32> to vector<8x128xf32>
    %12 = arith.addf %9, %11 : vector<8x128xf32>
    %c0_10 = arith.constant 0 : index
    %c0_11 = arith.constant 0 : index
    %13 = vector.load %arg6[%c0_10, %c0_11] : memref<8x128xf32, #tpu.memory_space<vmem>>, vector<8x128xf32>
    tpu.vector_store %arg6[%c0_10, %c0_11], %12 {strides = array<i32>} : memref<8x128xf32, #tpu.memory_space<vmem>>, vector<8x128xf32>,
    return
  }
  func.func @transform_0(%arg0: i32) -> (i32, i32) {
    %c0_i32 = arith.constant 0 : i32
    %c0_i32_0 = arith.constant 0 : i32
    return %arg0, %c0_i32 : i32, i32
  }
  func.func @transform_1(%arg0: i32) -> (i32, i32) {
    %c0_i32 = arith.constant 0 : i32
    %c0_i32_0 = arith.constant 0 : i32
    %c0_i32_1 = arith.constant 0 : i32
    return %c0_i32, %c0_i32_0 : i32, i32
  }
  func.func @transform_2(%arg0: i32) -> (i32, i32) {
    %c0_i32 = arith.constant 0 : i32
    %c0_i32_0 = arith.constant 0 : i32
    %c0_i32_1 = arith.constant 0 : i32
    return %c0_i32, %c0_i32_0 : i32, i32
  }
  func.func @transform_3(%arg0: i32) -> (i32, i32) {
    %c0_i32 = arith.constant 0 : i32
    %c0_i32_0 = arith.constant 0 : i32
    %c0_i32_1 = arith.constant 0 : i32
    return %c0_i32, %c0_i32_0 : i32, i32
  }
  func.func @transform_4(%arg0: i32) -> (i32, i32) {
    %c0_i32 = arith.constant 0 : i32
    %c0_i32_0 = arith.constant 0 : i32
    %c0_i32_1 = arith.constant 0 : i32
    return %c0_i32, %c0_i32_0 : i32, i32
  }
  func.func @transform_5(%arg0: i32) -> (i32, i32) {
    %c0_i32 = arith.constant 0 : i32
    %c0_i32_0 = arith.constant 0 : i32
    return %arg0, %c0_i32 : i32, i32
  }
}

</mosaic_0001>

<llo_original>
// kernel: tpu_custom_call.1
$region0: #{tpu_custom_call.1}
  #allocation0 [shape = 'u32[]', space=smem, size = 0x4, offset = 0x4, fixed_abs, tag = 'smem constant byte address 0x4 - core index']
  #allocation1 [shape = 'u32[72,128]{1,0:T(1,128)}', space=vmem, size = 0x9000, scoped, tag = 'internal scratch']
  %s0 = inlined_call_operand.hbm [shape: bf16[8,128], index: 0, kind: input, shape index: {}]
  %s1 = inlined_call_operand.hbm [shape: bf16[128,128], index: 1, kind: input, shape index: {}]
  %s2 = inlined_call_operand.vmem [shape: f32[1,128], index: 2, kind: input, shape index: {}]
  %s3 = inlined_call_operand.hbm [shape: bf16[128,128], index: 3, kind: input, shape index: {}]
  %s4 = inlined_call_operand.vmem [shape: f32[1,128], index: 4, kind: input, shape index: {}]
  %s5 = inlined_call_operand.hbm [shape: f32[8,128], index: 5, kind: output, shape index: {}]
  %s6 = sld [smem:[#allocation0]]
  $region42: #{tpu_custom_call.1} parent=0
    _
  %s8 = ssub.s32 1, %s6
  %s9 = scalar_select 0, %s8, %s6
  $region1: #{tpu_custom_call.1} parent=0
    #allocation2 [shape = 'u8[2048]{0}', space=vmem, size = 0x800, scoped, tag = 'input window, operand 0, single buffered']
    #allocation3 [shape = 's32[1]{0}', space=sflag, size = 0x4, scoped, tag = 'scoped memory for tpu_custom_call.1']
    #allocation4 [shape = 's32[1]{0}', space=sflag, size = 0x4, scoped, tag = 'scoped memory for tpu_custom_call.1']
    #allocation5 [shape = 'u8[32768]{0}', space=vmem, size = 0x8000, scoped, tag = 'input window, operand 1, single buffered']
    #allocation6 [shape = 's32[1]{0}', space=sflag, size = 0x4, scoped, tag = 'scoped memory for tpu_custom_call.1']
    #allocation7 [shape = 'u8[32768]{0}', space=vmem, size = 0x8000, scoped, tag = 'input window, operand 3, single buffered']
    #allocation8 [shape = 'u8[4096]{0}', space=vmem, size = 0x1000, scoped, tag = 'output window, operand 0, single buffered']
    %10 = vsyncpa [#allocation3], 0
    %11 = vsyncpa [#allocation6], 0
    %12 = vsyncpa [#allocation4], 0
    // Predicated region
    $region2: #{tpu_custom_call.1} parent=1 // pred_check
      _
    $region3: #{tpu_custom_call.1} parent=1 // pred_check_branch
      %14 = sbr.rel (0) target = $region5
    $region4: #{tpu_custom_call.1} parent=1 // pred_region
      %16 = vsyncadd [#allocation3], 0
      %s18 = sshll.u32 %s0, 4
      %s19 = int_to_ptr.hbm [resolvable:$true] %s18
      %s20 = sshll.u32 [#allocation2], 4
      %s21 = int_to_ptr.vmem [resolvable:$true] %s20
      %23 = dma.hbm_to_vmem [thread:$0]  %s19, 64, %s21, [#allocation3]
    $region5: #{tpu_custom_call.1} parent=1 // pred_fallthru
      _
    // Predicated region
    $region6: #{tpu_custom_call.1} parent=1 // pred_check
      _
    $region7: #{tpu_custom_call.1} parent=1 // pred_check_branch
      %25 = sbr.rel (0) target = $region9
    $region8: #{tpu_custom_call.1} parent=1 // pred_region
      %27 = vsyncadd [#allocation6], 0
      %s28 = sshll.u32 %s1, 4
      %s29 = int_to_ptr.hbm [resolvable:$true] %s28
      %s30 = sshll.u32 [#allocation5], 4
      %s31 = int_to_ptr.vmem [resolvable:$true] %s30
      %36 = dma.hbm_to_vmem [thread:$0]  %s29, 1024, %s31, [#allocation6], 64, 64, 4
    $region9: #{tpu_custom_call.1} parent=1 // pred_fallthru
      _
    // Predicated region
    $region10: #{tpu_custom_call.1} parent=1 // pred_check
      _
    $region11: #{tpu_custom_call.1} parent=1 // pred_check_branch
      %38 = sbr.rel (0) target = $region13
    $region12: #{tpu_custom_call.1} parent=1 // pred_region
      _
    $region13: #{tpu_custom_call.1} parent=1 // pred_fallthru
      _
    // Predicated region
    $region14: #{tpu_custom_call.1} parent=1 // pred_check
      _
    $region15: #{tpu_custom_call.1} parent=1 // pred_check_branch
      %40 = sbr.rel (0) target = $region17
    $region16: #{tpu_custom_call.1} parent=1 // pred_region
      %42 = vsyncadd [#allocation6], 0
      %s43 = sshll.u32 %s3, 4
      %s44 = int_to_ptr.hbm [resolvable:$true] %s43
      %s45 = sshll.u32 [#allocation7], 4
      %s46 = int_to_ptr.vmem [resolvable:$true] %s45
      %51 = dma.hbm_to_vmem [thread:$0]  %s44, 1024, %s46, [#allocation6], 64, 64, 4
    $region17: #{tpu_custom_call.1} parent=1 // pred_fallthru
      _
    // Predicated region
    $region18: #{tpu_custom_call.1} parent=1 // pred_check
      _
    $region19: #{tpu_custom_call.1} parent=1 // pred_check_branch
      %53 = sbr.rel (0) target = $region21
    $region20: #{tpu_custom_call.1} parent=1 // pred_region
      _
    $region21: #{tpu_custom_call.1} parent=1 // pred_fallthru
      _
    // Predicated region
    $region22: #{tpu_custom_call.1} parent=1 // pred_check
      _
    $region23: #{tpu_custom_call.1} parent=1 // pred_check_branch
      %55 = sbr.rel (0) target = $region25
    $region24: #{tpu_custom_call.1} parent=1 // pred_region
      %57 = dma.done [#allocation3], 64
    $region25: #{tpu_custom_call.1} parent=1 // pred_fallthru
      _
    // Predicated region
    $region26: #{tpu_custom_call.1} parent=1 // pred_check
      _
    $region27: #{tpu_custom_call.1} parent=1 // pred_check_branch
      %59 = sbr.rel (0) target = $region29
    $region28: #{tpu_custom_call.1} parent=1 // pred_region
      %61 = dma.done [#allocation6], 1024
    $region29: #{tpu_custom_call.1} parent=1 // pred_fallthru
      _
    // Predicated region
    $region30: #{tpu_custom_call.1} parent=1 // pred_check
      _
    $region31: #{tpu_custom_call.1} parent=1 // pred_check_branch
      %63 = sbr.rel (0) target = $region33
    $region32: #{tpu_custom_call.1} parent=1 // pred_region
      %65 = dma.done [#allocation6], 1024
    $region33: #{tpu_custom_call.1} parent=1 // pred_fallthru
      _
    %v66 = vld [vmem:[#allocation2] sm:$0xf]
    %v67 = vld [vmem:[#allocation5] sm:$0xf]
    %v68 = vld [vmem:[#allocation5 + $0x4] sm:$0xf]
    %v69 = vld [vmem:[#allocation5 + $0x8] sm:$0xf]
    %v70 = vld [vmem:[#allocation5 + $0xc] sm:$0xf]
    %v71 = vld [vmem:[#allocation5 + $0x10] sm:$0xf]
    %v72 = vld [vmem:[#allocation5 + $0x14] sm:$0xf]
    %v73 = vld [vmem:[#allocation5 + $0x18] sm:$0xf]
    %v74 = vld [vmem:[#allocation5 + $0x1c] sm:$0xf]
    %v75 = vld [vmem:[#allocation5 + $0x20] sm:$0xf]
    %v76 = vld [vmem:[#allocation5 + $0x24] sm:$0xf]
    %v77 = vld [vmem:[#allocation5 + $0x28] sm:$0xf]
    %v78 = vld [vmem:[#allocation5 + $0x2c] sm:$0xf]
    %v79 = vld [vmem:[#allocation5 + $0x30] sm:$0xf]
    %v80 = vld [vmem:[#allocation5 + $0x34] sm:$0xf]
    %v81 = vld [vmem:[#allocation5 + $0x38] sm:$0xf]
    %v82 = vld [vmem:[#allocation5 + $0x3c] sm:$0xf]
    %v83 = vld [vmem:[%s2] sm:$0x1]
    %v85 = vperm.slane %v83, 0
    %v103 = vunpack.c.l.b16 %v67
    %v104 = vunpack.c.l.b16 %v68
    %v105 = vunpack.c.l.b16 %v69
    %v106 = vunpack.c.l.b16 %v70
    %v107 = vunpack.c.l.b16 %v71
    %v108 = vunpack.c.l.b16 %v72
    %v109 = vunpack.c.l.b16 %v73
    %v110 = vunpack.c.l.b16 %v74
    %v111 = vunpack.c.l.b16 %v75
    %v112 = vunpack.c.l.b16 %v76
    %v113 = vunpack.c.l.b16 %v77
    %v114 = vunpack.c.l.b16 %v78
    %v115 = vunpack.c.l.b16 %v79
    %v116 = vunpack.c.l.b16 %v80
    %v117 = vunpack.c.l.b16 %v81
    %v118 = vunpack.c.l.b16 %v82
    %v119 = vpack.c.b16 %v104, %v103
    %v120 = vpack.c.b16 %v106, %v105
    %v121 = vpack.c.b16 %v108, %v107
    %v122 = vpack.c.b16 %v110, %v109
    %v123 = vpack.c.b16 %v112, %v111
    %v124 = vpack.c.b16 %v114, %v113
    %v125 = vpack.c.b16 %v116, %v115
    %v126 = vpack.c.b16 %v118, %v117
    %135 = vmatpush.bf16.msra.mxu0 %v126
    %136 = vmatpush.bf16.msra.mxu0 %v125
    %137 = vmatpush.bf16.msra.mxu0 %v124
    %138 = vmatpush.bf16.msra.mxu0 %v123
    %139 = vmatpush.bf16.msra.mxu0 %v122
    %140 = vmatpush.bf16.msra.mxu0 %v121
    %141 = vmatpush.bf16.msra.mxu0 %v120
    %142 = vmatpush.bf16.msra.mxu0 %v119
    %143 = vmatmul.bf16.gmra.mxu0 %v66
    %v144 = vpop.f32.mrf.mxu0
    %v145 = vadd.f32 %v85, %v144
    %v146 = vpop.f32.mrf.mxu0
    %147 = vdwg.mxu0
    %v148 = vtanh.pop %v145
    %v149 = vpack.c.bf16 %v148, %v148
    %v150 = vld [vmem:[#allocation7] sm:$0xf]
    %v151 = vld [vmem:[#allocation7 + $0x4] sm:$0xf]
    %v152 = vld [vmem:[#allocation7 + $0x8] sm:$0xf]
    %v153 = vld [vmem:[#allocation7 + $0xc] sm:$0xf]
    %v154 = vld [vmem:[#allocation7 + $0x10] sm:$0xf]
    %v155 = vld [vmem:[#allocation7 + $0x14] sm:$0xf]
    %v156 = vld [vmem:[#allocation7 + $0x18] sm:$0xf]
    %v157 = vld [vmem:[#allocation7 + $0x1c] sm:$0xf]
    %v158 = vld [vmem:[#allocation7 + $0x20] sm:$0xf]
    %v159 = vld [vmem:[#allocation7 + $0x24] sm:$0xf]
    %v160 = vld [vmem:[#allocation7 + $0x28] sm:$0xf]
    %v161 = vld [vmem:[#allocation7 + $0x2c] sm:$0xf]
    %v162 = vld [vmem:[#allocation7 + $0x30] sm:$0xf]
    %v163 = vld [vmem:[#allocation7 + $0x34] sm:$0xf]
    %v164 = vld [vmem:[#allocation7 + $0x38] sm:$0xf]
    %v165 = vld [vmem:[#allocation7 + $0x3c] sm:$0xf]
    %v166 = vld [vmem:[%s4] sm:$0x1]
    %v168 = vperm.slane %v166, 0
    %v186 = vunpack.c.l.b16 %v150
    %v187 = vunpack.c.l.b16 %v151
    %v188 = vunpack.c.l.b16 %v152
    %v189 = vunpack.c.l.b16 %v153
    %v190 = vunpack.c.l.b16 %v154
    %v191 = vunpack.c.l.b16 %v155
    %v192 = vunpack.c.l.b16 %v156
    %v193 = vunpack.c.l.b16 %v157
    %v194 = vunpack.c.l.b16 %v158
    %v195 = vunpack.c.l.b16 %v159
    %v196 = vunpack.c.l.b16 %v160
    %v197 = vunpack.c.l.b16 %v161
    %v198 = vunpack.c.l.b16 %v162
    %v199 = vunpack.c.l.b16 %v163
    %v200 = vunpack.c.l.b16 %v164
    %v201 = vunpack.c.l.b16 %v165
    %v202 = vpack.c.b16 %v187, %v186
    %v203 = vpack.c.b16 %v189, %v188
    %v204 = vpack.c.b16 %v191, %v190
    %v205 = vpack.c.b16 %v193, %v192
    %v206 = vpack.c.b16 %v195, %v194
    %v207 = vpack.c.b16 %v197, %v196
    %v208 = vpack.c.b16 %v199, %v198
    %v209 = vpack.c.b16 %v201, %v200
    %218 = vmatpush.bf16.msra.mxu0 %v209
    %219 = vmatpush.bf16.msra.mxu0 %v208
    %220 = vmatpush.bf16.msra.mxu0 %v207
    %221 = vmatpush.bf16.msra.mxu0 %v206
    %222 = vmatpush.bf16.msra.mxu0 %v205
    %223 = vmatpush.bf16.msra.mxu0 %v204
    %224 = vmatpush.bf16.msra.mxu0 %v203
    %225 = vmatpush.bf16.msra.mxu0 %v202
    %226 = vmatmul.bf16.gmra.mxu0 %v149
    %v227 = vpop.f32.mrf.mxu0
    %v228 = vadd.f32 %v168, %v227
    %v229 = vpop.f32.mrf.mxu0
    %230 = vdwg.mxu0
    %231 = vst [vmem:[#allocation8] sm:$0xff] %v228
    // Predicated region
    $region34: #{tpu_custom_call.1} parent=1 // pred_check
      _
    $region35: #{tpu_custom_call.1} parent=1 // pred_check_branch
      %233 = sbr.rel (0) target = $region37
    $region36: #{tpu_custom_call.1} parent=1 // pred_region
      %235 = vsyncadd [#allocation4], 0
      %s237 = sshll.u32 [#allocation8], 4
      %s238 = int_to_ptr.vmem [resolvable:$true] %s237
      %s239 = sshll.u32 %s5, 4
      %s240 = int_to_ptr.hbm [resolvable:$true] %s239
      %242 = dma.vmem_to_hbm [thread:$0]  %s238, 128, %s240, [#allocation4]
    $region37: #{tpu_custom_call.1} parent=1 // pred_fallthru
      _
    // Predicated region
    $region38: #{tpu_custom_call.1} parent=1 // pred_check
      _
    $region39: #{tpu_custom_call.1} parent=1 // pred_check_branch
      %244 = sbr.rel (0) target = $region41
    $region40: #{tpu_custom_call.1} parent=1 // pred_region
      %246 = dma.done [#allocation4], 128
    $region41: #{tpu_custom_call.1} parent=1 // pred_fallthru
      _
    %247 = vsyncpa [#allocation3], 1
    %248 = vsyncpa [#allocation6], 1
    %249 = vsyncpa [#allocation4], 1

</llo_original>
